<compile_context>
chip_gen: v6e
topology: v6e:2x2x1
jax: 0.10.0
libtpu: 0.0.40
codegen_flags: <defaults>
</compile_context>

<pallas_src>
import jax
import jax.numpy as jnp
from jax import lax
from jax.experimental import pallas as pl
from jax.experimental.pallas import tpu as pltpu


_LANE = 128
_SUBLANE = 8
_CHUNK = 128                     # pred rows per one-hot compare block
_GROUP = _SUBLANE * _CHUNK       # 1024 rows covered by one (8,128) target slab


def _round_up(a, b):
    return (a + b - 1) // b * b


def _cdiv(a, b):
    return (a + b - 1) // b


def _nll_partial_sum_kernel(pred_ref, tgt_ref, psum_ref):
    """One grid step: psum tile <- sum_r pred[r, target[r]] over this row tile.

    pred_ref : (tile_n, C)            log-probabilities (f32 / bf16)
    tgt_ref  : (tile_n//128, 128) f32 lane-dense targets; invalid rows hold -1
    psum_ref : (8, 128) f32           every element = this tile's partial sum
    """
    tile_n, C = pred_ref.shape
    n_groups = tile_n // _GROUP

    # Hoisted constant: per-row class-column indices (compared exactly as f32).
    col_idx = lax.broadcasted_iota(jnp.int32, (_CHUNK, C), 1).astype(jnp.float32)

    def group_body(g, acc):
        # Aligned (8,128) slab of 1024 targets, lane-major.  One XLU transpose
        # turns it into (128, 8): column s holds the targets for pred rows
        # [g*1024 + s*128, g*1024 + (s+1)*128).
        slab = tgt_ref[pl.ds(pl.multiple_of(g * _SUBLANE, _SUBLANE), _SUBLANE), :]
        slab_t = jnp.transpose(slab, (1, 0))                       # (_CHUNK, 8)

        for s in range(_SUBLANE):                                   # static unroll
            r = pl.multiple_of(g * _GROUP + s * _CHUNK, _CHUNK)
            pred_c = pred_ref[pl.ds(r, _CHUNK), :].astype(jnp.float32)   # (_CHUNK, C)
            tgt_col = slab_t[:, s:s + 1]                                 # (_CHUNK, 1)
            # One-hot select.  Rows past the true N carry target -1 -> all-false
            # mask -> contribute exactly 0, so garbage rows of a partial last
            # block (and of an oversized single-step tile) never leak in.
            acc = acc + jnp.where(col_idx == tgt_col, pred_c, jnp.float32(0.0))
        return acc

    acc = lax.fori_loop(0, n_groups, group_body,
                        jnp.zeros((_CHUNK, C), jnp.float32))
    # Lane-dense, unmasked (8,128) store; the wrapper reads one element per tile.
    psum_ref[...] = jnp.full(psum_ref.shape, jnp.sum(acc), jnp.float32)


def _nll_reference(pred, target):
    """Plain-XLA fallback (tiny inputs / pathological shapes)."""
    idx = target.astype(jnp.int32)[:, None]
    picked = jnp.take_along_axis(pred, idx, axis=1).astype(jnp.float32)
    return -jnp.mean(picked)


def nll_loss_pallas(pred, target, *,
                    vmem_block_budget_bytes=16 * 1024 * 1024,
                    min_pallas_bytes=1 << 20):
    """pred: (N, C) log-probs (f32/bf16); target: (N,) int class ids in [0, C).

    Returns the scalar mean NLL, == torch.nn.functional.nll_loss(pred, target).
    """
    N, C = pred.shape
    itemsize = pred.dtype.itemsize
    pred_row_bytes = _round_up(C, _LANE) * itemsize     # lane-padded HBM/VMEM row
    tgt_row_bytes = 4                                   # lane-dense f32 target

    # Tiny inputs: a fused XLA gather+mean beats any kernel launch.
    if N * pred_row_bytes < min_pallas_bytes:
        return _nll_reference(pred, target)

    # ---- tile sizing --------------------------------------------------------
    # The budget covers the double-buffered pred + target input blocks.
    budget_rows = vmem_block_budget_bytes // (2 * (pred_row_bytes + tgt_row_bytes))
    if budget_rows < _GROUP:
        # Enormous C: even one 1024-row tile would not fit the budget.
        return _nll_reference(pred, target)
    budget_rows = (budget_rows // _GROUP) * _GROUP      # multiple of 1024 rows

    if N > _GROUP:
        # Large inputs: keep >= 2 grid steps so the "parallel" axis can shard
        # across both TensorCores on v7x megacore parts.
        half_rows = _round_up(_cdiv(N, 2), _GROUP)
        tile_n = max(_GROUP, min(budget_rows, half_rows))
    else:
        tile_n = _GROUP                                  # single small step

    num_steps = _cdiv(N, tile_n)
    n_pad = num_steps * tile_n

    # Lane-dense targets: 4 B/row of HBM traffic (vs 512 B/row for an (N,1)
    # int32 column).  Padded rows get -1 so they never match a class column.
    tgt = target.astype(jnp.float32)
    if n_pad != N:
        tgt = jnp.pad(tgt, (0, n_pad - N), constant_values=-1.0)
    tgt2d = tgt.reshape(n_pad // _CHUNK, _CHUNK)

    # Explicit scoped-VMEM limit: double-buffered inputs + headroom for output
    # tiles / in-kernel intermediates.  Above v5e's 16 MiB default scoped limit,
    # comfortably below v7x's 64 MiB physical VMEM at the default budget.
    in_buf_bytes = 2 * tile_n * (pred_row_bytes + tgt_row_bytes)
    vmem_limit = int(max(in_buf_bytes + (8 << 20), 32 << 20))

    psums = pl.pallas_call(
        _nll_partial_sum_kernel,
        out_shape=jax.ShapeDtypeStruct((num_steps * _SUBLANE, _LANE), jnp.float32),
        grid_spec=pltpu.PrefetchScalarGridSpec(
            num_scalar_prefetch=0,
            grid=(num_steps,),
            in_specs=[
                pl.BlockSpec((tile_n, C), lambda i: (i, 0)),
                pl.BlockSpec((tile_n // _CHUNK, _CHUNK), lambda i: (i, 0)),
            ],
            out_specs=pl.BlockSpec((_SUBLANE, _LANE), lambda i: (i, 0)),
        ),
        compiler_params=pltpu.CompilerParams(
            dimension_semantics=("parallel",),   # megacore-shardable on v7x
            vmem_limit_bytes=vmem_limit,
        ),
    )(pred, tgt2d)

    per_step = psums[::_SUBLANE, 0]              # one scalar per grid step
    return -(jnp.sum(per_step) / jnp.float32(N))


class GetLoss:
    """JAX/Pallas equivalent of the PyTorch `get_loss` module (no parameters)."""

    def __call__(self, pred, target, _unused=None):
        return nll_loss_pallas(pred, target)


if __name__ == "__main__":
    key = jax.random.PRNGKey(0)
    k1, k2, k3, k4 = jax.random.split(key, 4)

    # --- Pallas path, single grid step (part-seg style: 50 part classes) -----
    N1, C1 = 256, 50
    pred1 = jax.nn.log_softmax(jax.random.normal(k1, (N1, C1), jnp.float32), axis=-1)
    tgt1 = jax.random.randint(k2, (N1,), 0, C1, dtype=jnp.int32)
    loss1 = jax.block_until_ready(nll_loss_pallas(pred1, tgt1, min_pallas_bytes=0))
    ref1 = -jnp.mean(pred1[jnp.arange(N1), tgt1])
    assert jnp.allclose(loss1, ref1, atol=1e-5, rtol=1e-5), (loss1, ref1)

    # --- Pallas path, multi-step grid + non-divisible N (partial last block) -
    N2, C2 = 3000, 50
    pred2 = jax.nn.log_softmax(jax.random.normal(k3, (N2, C2), jnp.float32), axis=-1)
    tgt2 = jax.random.randint(k4, (N2,), 0, C2, dtype=jnp.int32)
    loss2 = jax.block_until_ready(nll_loss_pallas(pred2, tgt2, min_pallas_bytes=0))
    ref2 = -jnp.mean(pred2[jnp.arange(N2), tgt2])
    assert jnp.allclose(loss2, ref2, atol=1e-5, rtol=1e-5), (loss2, ref2)

    # --- module-style call (tiny input -> plain-JAX fast path) ---------------
    loss3 = jax.block_until_ready(GetLoss()(pred1, tgt1, None))
    assert jnp.allclose(loss3, ref1, atol=1e-5, rtol=1e-5), (loss3, ref1)

    print("KERNEL_OK")
</pallas_src>

<mosaic_0001>
module attributes {stable_mosaic.version = 11 : i64} {
  func.func @_nll_partial_sum_kernel(%arg0: i32, %arg1: memref<1024x50xf32, #tpu.memory_space<vmem>>, %arg2: memref<8x128xf32, #tpu.memory_space<vmem>>, %arg3: memref<8x128xf32, #tpu.memory_space<vmem>>) attributes {dimension_semantics = [#tpu.dimension_semantics<parallel>], iteration_bounds = array<i64: 1>, scalar_prefetch = 0 : i64, scratch_operands = 0 : i64, tpu.core_type = #tpu.core_type<tc>, window_params = [{transform_indices = @transform_0, window_bounds = array<i64: 1024, 50>}, {transform_indices = @transform_1, window_bounds = array<i64: 8, 128>}, {transform_indices = @transform_2, window_bounds = array<i64: 8, 128>}]} {
    %0 = tpu.iota {dimensions = array<i32: 1>} : vector<128x50xi32>
    %1 = arith.sitofp %0 : vector<128x50xi32> to vector<128x50xf32>
    %cst = arith.constant 0.000000e+00 : f32
    %2 = vector.broadcast %cst : f32 to vector<128x50xf32>
    %c0_i32 = arith.constant 0 : i32
    %c8_i32 = arith.constant 8 : i32
    %3 = arith.muli %c0_i32, %c8_i32 : i32
    %4 = tpu.assume_multiple %3, 8 : i32
    %5 = arith.index_cast %4 : i32 to index
    %c0 = arith.constant 0 : index
    %6 = vector.load %arg2[%5, %c0] : memref<8x128xf32, #tpu.memory_space<vmem>>, vector<8x128xf32>
    %7 = tpu.transpose %6, [1, 0] : vector<8x128xf32> -> vector<128x8xf32>
    %c1024_i32 = arith.constant 1024 : i32
    %8 = arith.muli %c0_i32, %c1024_i32 : i32
    %c0_i32_0 = arith.constant 0 : i32
    %9 = arith.addi %8, %c0_i32_0 : i32
    %10 = tpu.assume_multiple %9, 128 : i32
    %11 = arith.index_cast %10 : i32 to index
    %c0_1 = arith.constant 0 : index
    %12 = vector.load %arg1[%11, %c0_1] : memref<1024x50xf32, #tpu.memory_space<vmem>>, vector<128x50xf32>
    %13 = vector.extract_strided_slice %7 {offsets = [0, 0], sizes = [128, 1], strides = [1, 1]} : vector<128x8xf32> to vector<128x1xf32>
    %14 = vector.broadcast %13 : vector<128x1xf32> to vector<128x50xf32>
    %15 = arith.cmpf oeq, %1, %14 : vector<128x50xf32>
    %cst_2 = arith.constant 0.000000e+00 : f32
    %16 = vector.broadcast %cst_2 : f32 to vector<128x50xf32>
    %17 = arith.select %15, %12, %16 : vector<128x50xi1>, vector<128x50xf32>
    %18 = arith.addf %2, %17 : vector<128x50xf32>
    %c1024_i32_3 = arith.constant 1024 : i32
    %19 = arith.muli %c0_i32, %c1024_i32_3 : i32
    %c128_i32 = arith.constant 128 : i32
    %20 = arith.addi %19, %c128_i32 : i32
    %21 = tpu.assume_multiple %20, 128 : i32
    %22 = arith.index_cast %21 : i32 to index
    %c0_4 = arith.constant 0 : index
    %23 = vector.load %arg1[%22, %c0_4] : memref<1024x50xf32, #tpu.memory_space<vmem>>, vector<128x50xf32>
    %24 = vector.extract_strided_slice %7 {offsets = [0, 1], sizes = [128, 1], strides = [1, 1]} : vector<128x8xf32> to vector<128x1xf32>
    %25 = vector.broadcast %24 : vector<128x1xf32> to vector<128x50xf32>
    %26 = arith.cmpf oeq, %1, %25 : vector<128x50xf32>
    %cst_5 = arith.constant 0.000000e+00 : f32
    %27 = vector.broadcast %cst_5 : f32 to vector<128x50xf32>
    %28 = arith.select %26, %23, %27 : vector<128x50xi1>, vector<128x50xf32>
    %29 = arith.addf %18, %28 : vector<128x50xf32>
    %c1024_i32_6 = arith.constant 1024 : i32
    %30 = arith.muli %c0_i32, %c1024_i32_6 : i32
    %c256_i32 = arith.constant 256 : i32
    %31 = arith.addi %30, %c256_i32 : i32
    %32 = tpu.assume_multiple %31, 128 : i32
    %33 = arith.index_cast %32 : i32 to index
    %c0_7 = arith.constant 0 : index
    %34 = vector.load %arg1[%33, %c0_7] : memref<1024x50xf32, #tpu.memory_space<vmem>>, vector<128x50xf32>
    %35 = vector.extract_strided_slice %7 {offsets = [0, 2], sizes = [128, 1], strides = [1, 1]} : vector<128x8xf32> to vector<128x1xf32>
    %36 = vector.broadcast %35 : vector<128x1xf32> to vector<128x50xf32>
    %37 = arith.cmpf oeq, %1, %36 : vector<128x50xf32>
    %cst_8 = arith.constant 0.000000e+00 : f32
    %38 = vector.broadcast %cst_8 : f32 to vector<128x50xf32>
    %39 = arith.select %37, %34, %38 : vector<128x50xi1>, vector<128x50xf32>
    %40 = arith.addf %29, %39 : vector<128x50xf32>
    %c1024_i32_9 = arith.constant 1024 : i32
    %41 = arith.muli %c0_i32, %c1024_i32_9 : i32
    %c384_i32 = arith.constant 384 : i32
    %42 = arith.addi %41, %c384_i32 : i32
    %43 = tpu.assume_multiple %42, 128 : i32
    %44 = arith.index_cast %43 : i32 to index
    %c0_10 = arith.constant 0 : index
    %45 = vector.load %arg1[%44, %c0_10] : memref<1024x50xf32, #tpu.memory_space<vmem>>, vector<128x50xf32>
    %46 = vector.extract_strided_slice %7 {offsets = [0, 3], sizes = [128, 1], strides = [1, 1]} : vector<128x8xf32> to vector<128x1xf32>
    %47 = vector.broadcast %46 : vector<128x1xf32> to vector<128x50xf32>
    %48 = arith.cmpf oeq, %1, %47 : vector<128x50xf32>
    %cst_11 = arith.constant 0.000000e+00 : f32
    %49 = vector.broadcast %cst_11 : f32 to vector<128x50xf32>
    %50 = arith.select %48, %45, %49 : vector<128x50xi1>, vector<128x50xf32>
    %51 = arith.addf %40, %50 : vector<128x50xf32>
    %c1024_i32_12 = arith.constant 1024 : i32
    %52 = arith.muli %c0_i32, %c1024_i32_12 : i32
    %c512_i32 = arith.constant 512 : i32
    %53 = arith.addi %52, %c512_i32 : i32
    %54 = tpu.assume_multiple %53, 128 : i32
    %55 = arith.index_cast %54 : i32 to index
    %c0_13 = arith.constant 0 : index
    %56 = vector.load %arg1[%55, %c0_13] : memref<1024x50xf32, #tpu.memory_space<vmem>>, vector<128x50xf32>
    %57 = vector.extract_strided_slice %7 {offsets = [0, 4], sizes = [128, 1], strides = [1, 1]} : vector<128x8xf32> to vector<128x1xf32>
    %58 = vector.broadcast %57 : vector<128x1xf32> to vector<128x50xf32>
    %59 = arith.cmpf oeq, %1, %58 : vector<128x50xf32>
    %cst_14 = arith.constant 0.000000e+00 : f32
    %60 = vector.broadcast %cst_14 : f32 to vector<128x50xf32>
    %61 = arith.select %59, %56, %60 : vector<128x50xi1>, vector<128x50xf32>
    %62 = arith.addf %51, %61 : vector<128x50xf32>
    %c1024_i32_15 = arith.constant 1024 : i32
    %63 = arith.muli %c0_i32, %c1024_i32_15 : i32
    %c640_i32 = arith.constant 640 : i32
    %64 = arith.addi %63, %c640_i32 : i32
    %65 = tpu.assume_multiple %64, 128 : i32
    %66 = arith.index_cast %65 : i32 to index
    %c0_16 = arith.constant 0 : index
    %67 = vector.load %arg1[%66, %c0_16] : memref<1024x50xf32, #tpu.memory_space<vmem>>, vector<128x50xf32>
    %68 = vector.extract_strided_slice %7 {offsets = [0, 5], sizes = [128, 1], strides = [1, 1]} : vector<128x8xf32> to vector<128x1xf32>
    %69 = vector.broadcast %68 : vector<128x1xf32> to vector<128x50xf32>
    %70 = arith.cmpf oeq, %1, %69 : vector<128x50xf32>
    %cst_17 = arith.constant 0.000000e+00 : f32
    %71 = vector.broadcast %cst_17 : f32 to vector<128x50xf32>
    %72 = arith.select %70, %67, %71 : vector<128x50xi1>, vector<128x50xf32>
    %73 = arith.addf %62, %72 : vector<128x50xf32>
    %c1024_i32_18 = arith.constant 1024 : i32
    %74 = arith.muli %c0_i32, %c1024_i32_18 : i32
    %c768_i32 = arith.constant 768 : i32
    %75 = arith.addi %74, %c768_i32 : i32
    %76 = tpu.assume_multiple %75, 128 : i32
    %77 = arith.index_cast %76 : i32 to index
    %c0_19 = arith.constant 0 : index
    %78 = vector.load %arg1[%77, %c0_19] : memref<1024x50xf32, #tpu.memory_space<vmem>>, vector<128x50xf32>
    %79 = vector.extract_strided_slice %7 {offsets = [0, 6], sizes = [128, 1], strides = [1, 1]} : vector<128x8xf32> to vector<128x1xf32>
    %80 = vector.broadcast %79 : vector<128x1xf32> to vector<128x50xf32>
    %81 = arith.cmpf oeq, %1, %80 : vector<128x50xf32>
    %cst_20 = arith.constant 0.000000e+00 : f32
    %82 = vector.broadcast %cst_20 : f32 to vector<128x50xf32>
    %83 = arith.select %81, %78, %82 : vector<128x50xi1>, vector<128x50xf32>
    %84 = arith.addf %73, %83 : vector<128x50xf32>
    %c1024_i32_21 = arith.constant 1024 : i32
    %85 = arith.muli %c0_i32, %c1024_i32_21 : i32
    %c896_i32 = arith.constant 896 : i32
    %86 = arith.addi %85, %c896_i32 : i32
    %87 = tpu.assume_multiple %86, 128 : i32
    %88 = arith.index_cast %87 : i32 to index
    %c0_22 = arith.constant 0 : index
    %89 = vector.load %arg1[%88, %c0_22] : memref<1024x50xf32, #tpu.memory_space<vmem>>, vector<128x50xf32>
    %90 = vector.extract_strided_slice %7 {offsets = [0, 7], sizes = [128, 1], strides = [1, 1]} : vector<128x8xf32> to vector<128x1xf32>
    %91 = vector.broadcast %90 : vector<128x1xf32> to vector<128x50xf32>
    %92 = arith.cmpf oeq, %1, %91 : vector<128x50xf32>
    %cst_23 = arith.constant 0.000000e+00 : f32
    %93 = vector.broadcast %cst_23 : f32 to vector<128x50xf32>
    %94 = arith.select %92, %89, %93 : vector<128x50xi1>, vector<128x50xf32>
    %95 = arith.addf %84, %94 : vector<128x50xf32>
    %c1_i32 = arith.constant 1 : i32
    %96 = vector.shape_cast %95 : vector<128x50xf32> to vector<1x128x50xf32>
    %cst_24 = arith.constant dense<0.000000e+00> : vector<1xf32>
    %97 = vector.multi_reduction <add>, %96, %cst_24 [1, 2] : vector<1x128x50xf32> to vector<1xf32>
    %98 = vector.shape_cast %97 : vector<1xf32> to vector<1x1x1xf32>
    %99 = vector.extract %98[0, 0, 0] : f32 from vector<1x1x1xf32>
    %100 = vector.broadcast %99 : f32 to vector<8x128xf32>
    %c0_25 = arith.constant 0 : index
    %c0_26 = arith.constant 0 : index
    %101 = vector.load %arg3[%c0_25, %c0_26] : memref<8x128xf32, #tpu.memory_space<vmem>>, vector<8x128xf32>
    tpu.vector_store %arg3[%c0_25, %c0_26], %100 {strides = array<i32>} : memref<8x128xf32, #tpu.memory_space<vmem>>, vector<8x128xf32>,
    return
  }
  func.func @transform_0(%arg0: i32) -> (i32, i32) {
    %c0_i32 = arith.constant 0 : i32
    %c0_i32_0 = arith.constant 0 : i32
    return %arg0, %c0_i32 : i32, i32
  }
  func.func @transform_1(%arg0: i32) -> (i32, i32) {
    %c0_i32 = arith.constant 0 : i32
    %c0_i32_0 = arith.constant 0 : i32
    return %arg0, %c0_i32 : i32, i32
  }
  func.func @transform_2(%arg0: i32) -> (i32, i32) {
    %c0_i32 = arith.constant 0 : i32
    %c0_i32_0 = arith.constant 0 : i32
    return %arg0, %c0_i32 : i32, i32
  }
}

</mosaic_0001>

<llo_original>
// kernel: tpu_custom_call.1
$region0: #{tpu_custom_call.1}
  #allocation0 [shape = 'u32[]', space=smem, size = 0x4, offset = 0x4, fixed_abs, tag = 'smem constant byte address 0x4 - core index']
  #allocation1 [shape = 'u32[144,128]{1,0:T(1,128)}', space=vmem, size = 0x12000, scoped, tag = 'internal scratch']
  %s0 = inlined_call_operand.vmem [shape: f32[256,50], index: 0, kind: input, shape index: {}]
  %s1 = inlined_call_operand.vmem [shape: f32[8,128], index: 1, kind: input, shape index: {}]
  %s2 = inlined_call_operand.hbm [shape: f32[8,128], index: 2, kind: output, shape index: {}]
  %s3 = sld [smem:[#allocation0]]
  $region18: #{tpu_custom_call.1} parent=0
    _
  %s5 = ssub.s32 1, %s3
  %s6 = scalar_select 0, %s5, %s3
  $region1: #{tpu_custom_call.1} parent=0
    #allocation2 [shape = 'u8[4096]{0}', space=vmem, size = 0x1000, scoped, tag = 'output window, operand 0, single buffered']
    #allocation3 [shape = 's32[1]{0}', space=sflag, size = 0x4, scoped, tag = 'scoped memory for tpu_custom_call.1']
    %7 = vsyncpa [#allocation3], 0
    // Predicated region
    $region2: #{tpu_custom_call.1} parent=1 // pred_check
      _
    $region3: #{tpu_custom_call.1} parent=1 // pred_check_branch
      %9 = sbr.rel (0) target = $region5
    $region4: #{tpu_custom_call.1} parent=1 // pred_region
      _
    $region5: #{tpu_custom_call.1} parent=1 // pred_fallthru
      _
    // Predicated region
    $region6: #{tpu_custom_call.1} parent=1 // pred_check
      _
    $region7: #{tpu_custom_call.1} parent=1 // pred_check_branch
      %11 = sbr.rel (0) target = $region9
    $region8: #{tpu_custom_call.1} parent=1 // pred_region
      _
    $region9: #{tpu_custom_call.1} parent=1 // pred_fallthru
      _
    %v12 = vlaneseq
    %v13 = vand.u32 %v12, 127
    %v14 = vcvt.s32.f32 %v13
    %v15 = vld [vmem:[%s1] sm:$0xff]
    %16 = vxpose.xlu0.b32.start [1/16] %v15, 128
    %17 = vxpose.xlu0.b32.cont [2/16] 0.0, 128
    %18 = vxpose.xlu0.b32.cont [3/16] 0.0, 128
    %19 = vxpose.xlu0.b32.cont [4/16] 0.0, 128
    %20 = vxpose.xlu0.b32.cont [5/16] 0.0, 128
    %21 = vxpose.xlu0.b32.cont [6/16] 0.0, 128
    %22 = vxpose.xlu0.b32.cont [7/16] 0.0, 128
    %23 = vxpose.xlu0.b32.cont [8/16] 0.0, 128
    %24 = vxpose.xlu0.b32.cont [9/16] 0.0, 128
    %25 = vxpose.xlu0.b32.cont [10/16] 0.0, 128
    %26 = vxpose.xlu0.b32.cont [11/16] 0.0, 128
    %27 = vxpose.xlu0.b32.cont [12/16] 0.0, 128
    %28 = vxpose.xlu0.b32.cont [13/16] 0.0, 128
    %29 = vxpose.xlu0.b32.cont [14/16] 0.0, 128
    %30 = vxpose.xlu0.b32.cont [15/16] 0.0, 128
    %31 = vxpose.xlu0.b32.end [16/16] 0.0, 128
    %v32 = vpop.trf.xlu0
    %v33 = vpop.trf.xlu0
    %v34 = vpop.trf.xlu0
    %v35 = vpop.trf.xlu0
    %v36 = vpop.trf.xlu0
    %v37 = vpop.trf.xlu0
    %v38 = vpop.trf.xlu0
    %v39 = vpop.trf.xlu0
    %v40 = vpop.trf.xlu0
    %v41 = vpop.trf.xlu0
    %v42 = vpop.trf.xlu0
    %v43 = vpop.trf.xlu0
    %v44 = vpop.trf.xlu0
    %v45 = vpop.trf.xlu0
    %v46 = vpop.trf.xlu0
    %v47 = vpop.trf.xlu0
    %v48 = vld [vmem:[%s0] sm:$0xff]
    %v49 = vld [vmem:[%s0 + $0x8] sm:$0xff]
    %v50 = vld [vmem:[%s0 + $0x10] sm:$0xff]
    %v51 = vld [vmem:[%s0 + $0x18] sm:$0xff]
    %v52 = vld [vmem:[%s0 + $0x20] sm:$0xff]
    %v53 = vld [vmem:[%s0 + $0x28] sm:$0xff]
    %v54 = vld [vmem:[%s0 + $0x30] sm:$0xff]
    %v55 = vld [vmem:[%s0 + $0x38] sm:$0xff]
    %v56 = vld [vmem:[%s0 + $0x40] sm:$0xff]
    %v57 = vld [vmem:[%s0 + $0x48] sm:$0xff]
    %v58 = vld [vmem:[%s0 + $0x50] sm:$0xff]
    %v59 = vld [vmem:[%s0 + $0x58] sm:$0xff]
    %v60 = vld [vmem:[%s0 + $0x60] sm:$0xff]
    %v61 = vld [vmem:[%s0 + $0x68] sm:$0xff]
    %v62 = vld [vmem:[%s0 + $0x70] sm:$0xff]
    %v63 = vld [vmem:[%s0 + $0x78] sm:$0xff]
    %65 = vset.pattern.permute.xlu0 0
    %66 = vperm.xlu0 %65, %v32
    %v67 = vpop.permute.xlu0 %66
    %70 = vset.pattern.permute.xlu0 0
    %71 = vperm.xlu0 %70, %v33
    %v72 = vpop.permute.xlu0 %71
    %75 = vset.pattern.permute.xlu0 0
    %76 = vperm.xlu0 %75, %v34
    %v77 = vpop.permute.xlu0 %76
    %80 = vset.pattern.permute.xlu0 0
    %81 = vperm.xlu0 %80, %v35
    %v82 = vpop.permute.xlu0 %81
    %85 = vset.pattern.permute.xlu0 0
    %86 = vperm.xlu0 %85, %v36
    %v87 = vpop.permute.xlu0 %86
    %90 = vset.pattern.permute.xlu0 0
    %91 = vperm.xlu0 %90, %v37
    %v92 = vpop.permute.xlu0 %91
    %95 = vset.pattern.permute.xlu0 0
    %96 = vperm.xlu0 %95, %v38
    %v97 = vpop.permute.xlu0 %96
    %100 = vset.pattern.permute.xlu0 0
    %101 = vperm.xlu0 %100, %v39
    %v102 = vpop.permute.xlu0 %101
    %105 = vset.pattern.permute.xlu0 0
    %106 = vperm.xlu0 %105, %v40
    %v107 = vpop.permute.xlu0 %106
    %110 = vset.pattern.permute.xlu0 0
    %111 = vperm.xlu0 %110, %v41
    %v112 = vpop.permute.xlu0 %111
    %115 = vset.pattern.permute.xlu0 0
    %116 = vperm.xlu0 %115, %v42
    %v117 = vpop.permute.xlu0 %116
    %120 = vset.pattern.permute.xlu0 0
    %121 = vperm.xlu0 %120, %v43
    %v122 = vpop.permute.xlu0 %121
    %125 = vset.pattern.permute.xlu0 0
    %126 = vperm.xlu0 %125, %v44
    %v127 = vpop.permute.xlu0 %126
    %130 = vset.pattern.permute.xlu0 0
    %131 = vperm.xlu0 %130, %v45
    %v132 = vpop.permute.xlu0 %131
    %135 = vset.pattern.permute.xlu0 0
    %136 = vperm.xlu0 %135, %v46
    %v137 = vpop.permute.xlu0 %136
    %140 = vset.pattern.permute.xlu0 0
    %141 = vperm.xlu0 %140, %v47
    %v142 = vpop.permute.xlu0 %141
    %vm144 = vcmp.eq.f32.partialorder %v14, %v67
    %vm145 = vcmp.eq.f32.partialorder %v14, %v72
    %vm146 = vcmp.eq.f32.partialorder %v14, %v77
    %vm147 = vcmp.eq.f32.partialorder %v14, %v82
    %vm148 = vcmp.eq.f32.partialorder %v14, %v87
    %vm149 = vcmp.eq.f32.partialorder %v14, %v92
    %vm150 = vcmp.eq.f32.partialorder %v14, %v97
    %vm151 = vcmp.eq.f32.partialorder %v14, %v102
    %vm152 = vcmp.eq.f32.partialorder %v14, %v107
    %vm153 = vcmp.eq.f32.partialorder %v14, %v112
    %vm154 = vcmp.eq.f32.partialorder %v14, %v117
    %vm155 = vcmp.eq.f32.partialorder %v14, %v122
    %vm156 = vcmp.eq.f32.partialorder %v14, %v127
    %vm157 = vcmp.eq.f32.partialorder %v14, %v132
    %vm158 = vcmp.eq.f32.partialorder %v14, %v137
    %vm159 = vcmp.eq.f32.partialorder %v14, %v142
    %v160 = vsel %vm144, %v48, 0.0
    %v161 = vsel %vm145, %v49, 0.0
    %v162 = vsel %vm146, %v50, 0.0
    %v163 = vsel %vm147, %v51, 0.0
    %v164 = vsel %vm148, %v52, 0.0
    %v165 = vsel %vm149, %v53, 0.0
    %v166 = vsel %vm150, %v54, 0.0
    %v167 = vsel %vm151, %v55, 0.0
    %v168 = vsel %vm152, %v56, 0.0
    %v169 = vsel %vm153, %v57, 0.0
    %v170 = vsel %vm154, %v58, 0.0
    %v171 = vsel %vm155, %v59, 0.0
    %v172 = vsel %vm156, %v60, 0.0
    %v173 = vsel %vm157, %v61, 0.0
    %v174 = vsel %vm158, %v62, 0.0
    %v175 = vsel %vm159, %v63, 0.0
    %v176 = vadd.f32 %v160, 0.0
    %v177 = vadd.f32 %v161, 0.0
    %v178 = vadd.f32 %v162, 0.0
    %v179 = vadd.f32 %v163, 0.0
    %v180 = vadd.f32 %v164, 0.0
    %v181 = vadd.f32 %v165, 0.0
    %v182 = vadd.f32 %v166, 0.0
    %v183 = vadd.f32 %v167, 0.0
    %v184 = vadd.f32 %v168, 0.0
    %v185 = vadd.f32 %v169, 0.0
    %v186 = vadd.f32 %v170, 0.0
    %v187 = vadd.f32 %v171, 0.0
    %v188 = vadd.f32 %v172, 0.0
    %v189 = vadd.f32 %v173, 0.0
    %v190 = vadd.f32 %v174, 0.0
    %v191 = vadd.f32 %v175, 0.0
    %s192 = scalar_lea.vmem %s0, 128
    %v193 = vld [vmem:[%s192] sm:$0xff]
    %v194 = vld [vmem:[%s192 + $0x8] sm:$0xff]
    %v195 = vld [vmem:[%s192 + $0x10] sm:$0xff]
    %v196 = vld [vmem:[%s192 + $0x18] sm:$0xff]
    %v197 = vld [vmem:[%s192 + $0x20] sm:$0xff]
    %v198 = vld [vmem:[%s192 + $0x28] sm:$0xff]
    %v199 = vld [vmem:[%s192 + $0x30] sm:$0xff]
    %v200 = vld [vmem:[%s192 + $0x38] sm:$0xff]
    %v201 = vld [vmem:[%s192 + $0x40] sm:$0xff]
    %v202 = vld [vmem:[%s192 + $0x48] sm:$0xff]
    %v203 = vld [vmem:[%s192 + $0x50] sm:$0xff]
    %v204 = vld [vmem:[%s192 + $0x58] sm:$0xff]
    %v205 = vld [vmem:[%s192 + $0x60] sm:$0xff]
    %v206 = vld [vmem:[%s192 + $0x68] sm:$0xff]
    %v207 = vld [vmem:[%s192 + $0x70] sm:$0xff]
    %v208 = vld [vmem:[%s192 + $0x78] sm:$0xff]
    %209 = vset.pattern.permute.xlu0 1
    %210 = vperm.xlu0 %209, %v32
    %v211 = vpop.permute.xlu0 %210
    %213 = vset.pattern.permute.xlu0 1
    %214 = vperm.xlu0 %213, %v33
    %v215 = vpop.permute.xlu0 %214
    %217 = vset.pattern.permute.xlu0 1
    %218 = vperm.xlu0 %217, %v34
    %v219 = vpop.permute.xlu0 %218
    %221 = vset.pattern.permute.xlu0 1
    %222 = vperm.xlu0 %221, %v35
    %v223 = vpop.permute.xlu0 %222
    %225 = vset.pattern.permute.xlu0 1
    %226 = vperm.xlu0 %225, %v36
    %v227 = vpop.permute.xlu0 %226
    %229 = vset.pattern.permute.xlu0 1
    %230 = vperm.xlu0 %229, %v37
    %v231 = vpop.permute.xlu0 %230
    %233 = vset.pattern.permute.xlu0 1
    %234 = vperm.xlu0 %233, %v38
    %v235 = vpop.permute.xlu0 %234
    %237 = vset.pattern.permute.xlu0 1
    %238 = vperm.xlu0 %237, %v39
    %v239 = vpop.permute.xlu0 %238
    %241 = vset.pattern.permute.xlu0 1
    %242 = vperm.xlu0 %241, %v40
    %v243 = vpop.permute.xlu0 %242
    %245 = vset.pattern.permute.xlu0 1
    %246 = vperm.xlu0 %245, %v41
    %v247 = vpop.permute.xlu0 %246
    %249 = vset.pattern.permute.xlu0 1
    %250 = vperm.xlu0 %249, %v42
    %v251 = vpop.permute.xlu0 %250
    %253 = vset.pattern.permute.xlu0 1
    %254 = vperm.xlu0 %253, %v43
    %v255 = vpop.permute.xlu0 %254
    %257 = vset.pattern.permute.xlu0 1
    %258 = vperm.xlu0 %257, %v44
    %v259 = vpop.permute.xlu0 %258
    %261 = vset.pattern.permute.xlu0 1
    %262 = vperm.xlu0 %261, %v45
    %v263 = vpop.permute.xlu0 %262
    %265 = vset.pattern.permute.xlu0 1
    %266 = vperm.xlu0 %265, %v46
    %v267 = vpop.permute.xlu0 %266
    %269 = vset.pattern.permute.xlu0 1
    %270 = vperm.xlu0 %269, %v47
    %v271 = vpop.permute.xlu0 %270
    %vm273 = vcmp.eq.f32.partialorder %v14, %v211
    %vm274 = vcmp.eq.f32.partialorder %v14, %v215
    %vm275 = vcmp.eq.f32.partialorder %v14, %v219
    %vm276 = vcmp.eq.f32.partialorder %v14, %v223
    %vm277 = vcmp.eq.f32.partialorder %v14, %v227
    %vm278 = vcmp.eq.f32.partialorder %v14, %v231
    %vm279 = vcmp.eq.f32.partialorder %v14, %v235
    %vm280 = vcmp.eq.f32.partialorder %v14, %v239
    %vm281 = vcmp.eq.f32.partialorder %v14, %v243
    %vm282 = vcmp.eq.f32.partialorder %v14, %v247
    %vm283 = vcmp.eq.f32.partialorder %v14, %v251
    %vm284 = vcmp.eq.f32.partialorder %v14, %v255
    %vm285 = vcmp.eq.f32.partialorder %v14, %v259
    %vm286 = vcmp.eq.f32.partialorder %v14, %v263
    %vm287 = vcmp.eq.f32.partialorder %v14, %v267
    %vm288 = vcmp.eq.f32.partialorder %v14, %v271
    %v289 = vsel %vm273, %v193, 0.0
    %v290 = vsel %vm274, %v194, 0.0
    %v291 = vsel %vm275, %v195, 0.0
    %v292 = vsel %vm276, %v196, 0.0
    %v293 = vsel %vm277, %v197, 0.0
    %v294 = vsel %vm278, %v198, 0.0
    %v295 = vsel %vm279, %v199, 0.0
    %v296 = vsel %vm280, %v200, 0.0
    %v297 = vsel %vm281, %v201, 0.0
    %v298 = vsel %vm282, %v202, 0.0
    %v299 = vsel %vm283, %v203, 0.0
    %v300 = vsel %vm284, %v204, 0.0
    %v301 = vsel %vm285, %v205, 0.0
    %v302 = vsel %vm286, %v206, 0.0
    %v303 = vsel %vm287, %v207, 0.0
    %v304 = vsel %vm288, %v208, 0.0
    %v305 = vadd.f32 %v176, %v289
    %v306 = vadd.f32 %v177, %v290
    %v307 = vadd.f32 %v178, %v291
    %v308 = vadd.f32 %v179, %v292
    %v309 = vadd.f32 %v180, %v293
    %v310 = vadd.f32 %v181, %v294
    %v311 = vadd.f32 %v182, %v295
    %v312 = vadd.f32 %v183, %v296
    %v313 = vadd.f32 %v184, %v297
    %v314 = vadd.f32 %v185, %v298
    %v315 = vadd.f32 %v186, %v299
    %v316 = vadd.f32 %v187, %v300
    %v317 = vadd.f32 %v188, %v301
    %v318 = vadd.f32 %v189, %v302
    %v319 = vadd.f32 %v190, %v303
    %v320 = vadd.f32 %v191, %v304
    %s321 = scalar_lea.vmem %s0, 256
    %v322 = vld [vmem:[%s321] sm:$0xff]
    %v323 = vld [vmem:[%s321 + $0x8] sm:$0xff]
    %v324 = vld [vmem:[%s321 + $0x10] sm:$0xff]
    %v325 = vld [vmem:[%s321 + $0x18] sm:$0xff]
    %v326 = vld [vmem:[%s321 + $0x20] sm:$0xff]
    %v327 = vld [vmem:[%s321 + $0x28] sm:$0xff]
    %v328 = vld [vmem:[%s321 + $0x30] sm:$0xff]
    %v329 = vld [vmem:[%s321 + $0x38] sm:$0xff]
    %v330 = vld [vmem:[%s321 + $0x40] sm:$0xff]
    %v331 = vld [vmem:[%s321 + $0x48] sm:$0xff]
    %v332 = vld [vmem:[%s321 + $0x50] sm:$0xff]
    %v333 = vld [vmem:[%s321 + $0x58] sm:$0xff]
    %v334 = vld [vmem:[%s321 + $0x60] sm:$0xff]
    %v335 = vld [vmem:[%s321 + $0x68] sm:$0xff]
    %v336 = vld [vmem:[%s321 + $0x70] sm:$0xff]
    %v337 = vld [vmem:[%s321 + $0x78] sm:$0xff]
    %338 = vset.pattern.permute.xlu0 2
    %339 = vperm.xlu0 %338, %v32
    %v340 = vpop.permute.xlu0 %339
    %342 = vset.pattern.permute.xlu0 2
    %343 = vperm.xlu0 %342, %v33
    %v344 = vpop.permute.xlu0 %343
    %346 = vset.pattern.permute.xlu0 2
    %347 = vperm.xlu0 %346, %v34
    %v348 = vpop.permute.xlu0 %347
    %350 = vset.pattern.permute.xlu0 2
    %351 = vperm.xlu0 %350, %v35
    %v352 = vpop.permute.xlu0 %351
    %354 = vset.pattern.permute.xlu0 2
    %355 = vperm.xlu0 %354, %v36
    %v356 = vpop.permute.xlu0 %355
    %358 = vset.pattern.permute.xlu0 2
    %359 = vperm.xlu0 %358, %v37
    %v360 = vpop.permute.xlu0 %359
    %362 = vset.pattern.permute.xlu0 2
    %363 = vperm.xlu0 %362, %v38
    %v364 = vpop.permute.xlu0 %363
    %366 = vset.pattern.permute.xlu0 2
    %367 = vperm.xlu0 %366, %v39
    %v368 = vpop.permute.xlu0 %367
    %370 = vset.pattern.permute.xlu0 2
    %371 = vperm.xlu0 %370, %v40
    %v372 = vpop.permute.xlu0 %371
    %374 = vset.pattern.permute.xlu0 2
    %375 = vperm.xlu0 %374, %v41
    %v376 = vpop.permute.xlu0 %375
    %378 = vset.pattern.permute.xlu0 2
    %379 = vperm.xlu0 %378, %v42
    %v380 = vpop.permute.xlu0 %379
    %382 = vset.pattern.permute.xlu0 2
    %383 = vperm.xlu0 %382, %v43
    %v384 = vpop.permute.xlu0 %383
    %386 = vset.pattern.permute.xlu0 2
    %387 = vperm.xlu0 %386, %v44
    %v388 = vpop.permute.xlu0 %387
    %390 = vset.pattern.permute.xlu0 2
    %391 = vperm.xlu0 %390, %v45
    %v392 = vpop.permute.xlu0 %391
    %394 = vset.pattern.permute.xlu0 2
    %395 = vperm.xlu0 %394, %v46
    %v396 = vpop.permute.xlu0 %395
    %398 = vset.pattern.permute.xlu0 2
    %399 = vperm.xlu0 %398, %v47
    %v400 = vpop.permute.xlu0 %399
    %vm402 = vcmp.eq.f32.partialorder %v14, %v340
    %vm403 = vcmp.eq.f32.partialorder %v14, %v344
    %vm404 = vcmp.eq.f32.partialorder %v14, %v348
    %vm405 = vcmp.eq.f32.partialorder %v14, %v352
    %vm406 = vcmp.eq.f32.partialorder %v14, %v356
    %vm407 = vcmp.eq.f32.partialorder %v14, %v360
    %vm408 = vcmp.eq.f32.partialorder %v14, %v364
    %vm409 = vcmp.eq.f32.partialorder %v14, %v368
    %vm410 = vcmp.eq.f32.partialorder %v14, %v372
    %vm411 = vcmp.eq.f32.partialorder %v14, %v376
    %vm412 = vcmp.eq.f32.partialorder %v14, %v380
    %vm413 = vcmp.eq.f32.partialorder %v14, %v384
    %vm414 = vcmp.eq.f32.partialorder %v14, %v388
    %vm415 = vcmp.eq.f32.partialorder %v14, %v392
    %vm416 = vcmp.eq.f32.partialorder %v14, %v396
    %vm417 = vcmp.eq.f32.partialorder %v14, %v400
    %v418 = vsel %vm402, %v322, 0.0
    %v419 = vsel %vm403, %v323, 0.0
    %v420 = vsel %vm404, %v324, 0.0
    %v421 = vsel %vm405, %v325, 0.0
    %v422 = vsel %vm406, %v326, 0.0
    %v423 = vsel %vm407, %v327, 0.0
    %v424 = vsel %vm408, %v328, 0.0
    %v425 = vsel %vm409, %v329, 0.0
    %v426 = vsel %vm410, %v330, 0.0
    %v427 = vsel %vm411, %v331, 0.0
    %v428 = vsel %vm412, %v332, 0.0
    %v429 = vsel %vm413, %v333, 0.0
    %v430 = vsel %vm414, %v334, 0.0
    %v431 = vsel %vm415, %v335, 0.0
    %v432 = vsel %vm416, %v336, 0.0
    %v433 = vsel %vm417, %v337, 0.0
    %v434 = vadd.f32 %v305, %v418
    %v435 = vadd.f32 %v306, %v419
    %v436 = vadd.f32 %v307, %v420
    %v437 = vadd.f32 %v308, %v421
    %v438 = vadd.f32 %v309, %v422
    %v439 = vadd.f32 %v310, %v423
    %v440 = vadd.f32 %v311, %v424
    %v441 = vadd.f32 %v312, %v425
    %v442 = vadd.f32 %v313, %v426
    %v443 = vadd.f32 %v314, %v427
    %v444 = vadd.f32 %v315, %v428
    %v445 = vadd.f32 %v316, %v429
    %v446 = vadd.f32 %v317, %v430
    %v447 = vadd.f32 %v318, %v431
    %v448 = vadd.f32 %v319, %v432
    %v449 = vadd.f32 %v320, %v433
    %s450 = scalar_lea.vmem %s0, 384
    %v451 = vld [vmem:[%s450] sm:$0xff]
    %v452 = vld [vmem:[%s450 + $0x8] sm:$0xff]
    %v453 = vld [vmem:[%s450 + $0x10] sm:$0xff]
    %v454 = vld [vmem:[%s450 + $0x18] sm:$0xff]
    %v455 = vld [vmem:[%s450 + $0x20] sm:$0xff]
    %v456 = vld [vmem:[%s450 + $0x28] sm:$0xff]
    %v457 = vld [vmem:[%s450 + $0x30] sm:$0xff]
    %v458 = vld [vmem:[%s450 + $0x38] sm:$0xff]
    %v459 = vld [vmem:[%s450 + $0x40] sm:$0xff]
    %v460 = vld [vmem:[%s450 + $0x48] sm:$0xff]
    %v461 = vld [vmem:[%s450 + $0x50] sm:$0xff]
    %v462 = vld [vmem:[%s450 + $0x58] sm:$0xff]
    %v463 = vld [vmem:[%s450 + $0x60] sm:$0xff]
    %v464 = vld [vmem:[%s450 + $0x68] sm:$0xff]
    %v465 = vld [vmem:[%s450 + $0x70] sm:$0xff]
    %v466 = vld [vmem:[%s450 + $0x78] sm:$0xff]
    %467 = vset.pattern.permute.xlu0 3
    %468 = vperm.xlu0 %467, %v32
    %v469 = vpop.permute.xlu0 %468
    %471 = vset.pattern.permute.xlu0 3
    %472 = vperm.xlu0 %471, %v33
    %v473 = vpop.permute.xlu0 %472
    %475 = vset.pattern.permute.xlu0 3
    %476 = vperm.xlu0 %475, %v34
    %v477 = vpop.permute.xlu0 %476
    %479 = vset.pattern.permute.xlu0 3
    %480 = vperm.xlu0 %479, %v35
    %v481 = vpop.permute.xlu0 %480
    %483 = vset.pattern.permute.xlu0 3
    %484 = vperm.xlu0 %483, %v36
    %v485 = vpop.permute.xlu0 %484
    %487 = vset.pattern.permute.xlu0 3
    %488 = vperm.xlu0 %487, %v37
    %v489 = vpop.permute.xlu0 %488
    %491 = vset.pattern.permute.xlu0 3
    %492 = vperm.xlu0 %491, %v38
    %v493 = vpop.permute.xlu0 %492
    %495 = vset.pattern.permute.xlu0 3
    %496 = vperm.xlu0 %495, %v39
    %v497 = vpop.permute.xlu0 %496
    %499 = vset.pattern.permute.xlu0 3
    %500 = vperm.xlu0 %499, %v40
    %v501 = vpop.permute.xlu0 %500
    %503 = vset.pattern.permute.xlu0 3
    %504 = vperm.xlu0 %503, %v41
    %v505 = vpop.permute.xlu0 %504
    %507 = vset.pattern.permute.xlu0 3
    %508 = vperm.xlu0 %507, %v42
    %v509 = vpop.permute.xlu0 %508
    %511 = vset.pattern.permute.xlu0 3
    %512 = vperm.xlu0 %511, %v43
    %v513 = vpop.permute.xlu0 %512
    %515 = vset.pattern.permute.xlu0 3
    %516 = vperm.xlu0 %515, %v44
    %v517 = vpop.permute.xlu0 %516
    %519 = vset.pattern.permute.xlu0 3
    %520 = vperm.xlu0 %519, %v45
    %v521 = vpop.permute.xlu0 %520
    %523 = vset.pattern.permute.xlu0 3
    %524 = vperm.xlu0 %523, %v46
    %v525 = vpop.permute.xlu0 %524
    %527 = vset.pattern.permute.xlu0 3
    %528 = vperm.xlu0 %527, %v47
    %v529 = vpop.permute.xlu0 %528
    %vm531 = vcmp.eq.f32.partialorder %v14, %v469
    %vm532 = vcmp.eq.f32.partialorder %v14, %v473
    %vm533 = vcmp.eq.f32.partialorder %v14, %v477
    %vm534 = vcmp.eq.f32.partialorder %v14, %v481
    %vm535 = vcmp.eq.f32.partialorder %v14, %v485
    %vm536 = vcmp.eq.f32.partialorder %v14, %v489
    %vm537 = vcmp.eq.f32.partialorder %v14, %v493
    %vm538 = vcmp.eq.f32.partialorder %v14, %v497
    %vm539 = vcmp.eq.f32.partialorder %v14, %v501
    %vm540 = vcmp.eq.f32.partialorder %v14, %v505
    %vm541 = vcmp.eq.f32.partialorder %v14, %v509
    %vm542 = vcmp.eq.f32.partialorder %v14, %v513
    %vm543 = vcmp.eq.f32.partialorder %v14, %v517
    %vm544 = vcmp.eq.f32.partialorder %v14, %v521
    %vm545 = vcmp.eq.f32.partialorder %v14, %v525
    %vm546 = vcmp.eq.f32.partialorder %v14, %v529
    %v547 = vsel %vm531, %v451, 0.0
    %v548 = vsel %vm532, %v452, 0.0
    %v549 = vsel %vm533, %v453, 0.0
    %v550 = vsel %vm534, %v454, 0.0
    %v551 = vsel %vm535, %v455, 0.0
    %v552 = vsel %vm536, %v456, 0.0
    %v553 = vsel %vm537, %v457, 0.0
    %v554 = vsel %vm538, %v458, 0.0
    %v555 = vsel %vm539, %v459, 0.0
    %v556 = vsel %vm540, %v460, 0.0
    %v557 = vsel %vm541, %v461, 0.0
    %v558 = vsel %vm542, %v462, 0.0
    %v559 = vsel %vm543, %v463, 0.0
    %v560 = vsel %vm544, %v464, 0.0
    %v561 = vsel %vm545, %v465, 0.0
    %v562 = vsel %vm546, %v466, 0.0
    %v563 = vadd.f32 %v434, %v547
    %v564 = vadd.f32 %v435, %v548
    %v565 = vadd.f32 %v436, %v549
    %v566 = vadd.f32 %v437, %v550
    %v567 = vadd.f32 %v438, %v551
    %v568 = vadd.f32 %v439, %v552
    %v569 = vadd.f32 %v440, %v553
    %v570 = vadd.f32 %v441, %v554
    %v571 = vadd.f32 %v442, %v555
    %v572 = vadd.f32 %v443, %v556
    %v573 = vadd.f32 %v444, %v557
    %v574 = vadd.f32 %v445, %v558
    %v575 = vadd.f32 %v446, %v559
    %v576 = vadd.f32 %v447, %v560
    %v577 = vadd.f32 %v448, %v561
    %v578 = vadd.f32 %v449, %v562
    %s579 = scalar_lea.vmem %s0, 512
    %v580 = vld [vmem:[%s579] sm:$0xff]
    %v581 = vld [vmem:[%s579 + $0x8] sm:$0xff]
    %v582 = vld [vmem:[%s579 + $0x10] sm:$0xff]
    %v583 = vld [vmem:[%s579 + $0x18] sm:$0xff]
    %v584 = vld [vmem:[%s579 + $0x20] sm:$0xff]
    %v585 = vld [vmem:[%s579 + $0x28] sm:$0xff]
    %v586 = vld [vmem:[%s579 + $0x30] sm:$0xff]
    %v587 = vld [vmem:[%s579 + $0x38] sm:$0xff]
    %v588 = vld [vmem:[%s579 + $0x40] sm:$0xff]
    %v589 = vld [vmem:[%s579 + $0x48] sm:$0xff]
    %v590 = vld [vmem:[%s579 + $0x50] sm:$0xff]
    %v591 = vld [vmem:[%s579 + $0x58] sm:$0xff]
    %v592 = vld [vmem:[%s579 + $0x60] sm:$0xff]
    %v593 = vld [vmem:[%s579 + $0x68] sm:$0xff]
    %v594 = vld [vmem:[%s579 + $0x70] sm:$0xff]
    %v595 = vld [vmem:[%s579 + $0x78] sm:$0xff]
    %596 = vset.pattern.permute.xlu0 4
    %597 = vperm.xlu0 %596, %v32
    %v598 = vpop.permute.xlu0 %597
    %600 = vset.pattern.permute.xlu0 4
    %601 = vperm.xlu0 %600, %v33
    %v602 = vpop.permute.xlu0 %601
    %604 = vset.pattern.permute.xlu0 4
    %605 = vperm.xlu0 %604, %v34
    %v606 = vpop.permute.xlu0 %605
    %608 = vset.pattern.permute.xlu0 4
    %609 = vperm.xlu0 %608, %v35
    %v610 = vpop.permute.xlu0 %609
    %612 = vset.pattern.permute.xlu0 4
    %613 = vperm.xlu0 %612, %v36
    %v614 = vpop.permute.xlu0 %613
    %616 = vset.pattern.permute.xlu0 4
    %617 = vperm.xlu0 %616, %v37
    %v618 = vpop.permute.xlu0 %617
    %620 = vset.pattern.permute.xlu0 4
    %621 = vperm.xlu0 %620, %v38
    %v622 = vpop.permute.xlu0 %621
    %624 = vset.pattern.permute.xlu0 4
    %625 = vperm.xlu0 %624, %v39
    %v626 = vpop.permute.xlu0 %625
    %628 = vset.pattern.permute.xlu0 4
    %629 = vperm.xlu0 %628, %v40
    %v630 = vpop.permute.xlu0 %629
    %632 = vset.pattern.permute.xlu0 4
    %633 = vperm.xlu0 %632, %v41
    %v634 = vpop.permute.xlu0 %633
    %636 = vset.pattern.permute.xlu0 4
    %637 = vperm.xlu0 %636, %v42
    %v638 = vpop.permute.xlu0 %637
    %640 = vset.pattern.permute.xlu0 4
    %641 = vperm.xlu0 %640, %v43
    %v642 = vpop.permute.xlu0 %641
    %644 = vset.pattern.permute.xlu0 4
    %645 = vperm.xlu0 %644, %v44
    %v646 = vpop.permute.xlu0 %645
    %648 = vset.pattern.permute.xlu0 4
    %649 = vperm.xlu0 %648, %v45
    %v650 = vpop.permute.xlu0 %649
    %652 = vset.pattern.permute.xlu0 4
    %653 = vperm.xlu0 %652, %v46
    %v654 = vpop.permute.xlu0 %653
    %656 = vset.pattern.permute.xlu0 4
    %657 = vperm.xlu0 %656, %v47
    %v658 = vpop.permute.xlu0 %657
    %vm660 = vcmp.eq.f32.partialorder %v14, %v598
    %vm661 = vcmp.eq.f32.partialorder %v14, %v602
    %vm662 = vcmp.eq.f32.partialorder %v14, %v606
    %vm663 = vcmp.eq.f32.partialorder %v14, %v610
    %vm664 = vcmp.eq.f32.partialorder %v14, %v614
    %vm665 = vcmp.eq.f32.partialorder %v14, %v618
    %vm666 = vcmp.eq.f32.partialorder %v14, %v622
    %vm667 = vcmp.eq.f32.partialorder %v14, %v626
    %vm668 = vcmp.eq.f32.partialorder %v14, %v630
    %vm669 = vcmp.eq.f32.partialorder %v14, %v634
    %vm670 = vcmp.eq.f32.partialorder %v14, %v638
    %vm671 = vcmp.eq.f32.partialorder %v14, %v642
    %vm672 = vcmp.eq.f32.partialorder %v14, %v646
    %vm673 = vcmp.eq.f32.partialorder %v14, %v650
    %vm674 = vcmp.eq.f32.partialorder %v14, %v654
    %vm675 = vcmp.eq.f32.partialorder %v14, %v658
    %v676 = vsel %vm660, %v580, 0.0
    %v677 = vsel %vm661, %v581, 0.0
    %v678 = vsel %vm662, %v582, 0.0
    %v679 = vsel %vm663, %v583, 0.0
    %v680 = vsel %vm664, %v584, 0.0
    %v681 = vsel %vm665, %v585, 0.0
    %v682 = vsel %vm666, %v586, 0.0
    %v683 = vsel %vm667, %v587, 0.0
    %v684 = vsel %vm668, %v588, 0.0
    %v685 = vsel %vm669, %v589, 0.0
    %v686 = vsel %vm670, %v590, 0.0
    %v687 = vsel %vm671, %v591, 0.0
    %v688 = vsel %vm672, %v592, 0.0
    %v689 = vsel %vm673, %v593, 0.0
    %v690 = vsel %vm674, %v594, 0.0
    %v691 = vsel %vm675, %v595, 0.0
    %v692 = vadd.f32 %v563, %v676
    %v693 = vadd.f32 %v564, %v677
    %v694 = vadd.f32 %v565, %v678
    %v695 = vadd.f32 %v566, %v679
    %v696 = vadd.f32 %v567, %v680
    %v697 = vadd.f32 %v568, %v681
    %v698 = vadd.f32 %v569, %v682
    %v699 = vadd.f32 %v570, %v683
    %v700 = vadd.f32 %v571, %v684
    %v701 = vadd.f32 %v572, %v685
    %v702 = vadd.f32 %v573, %v686
    %v703 = vadd.f32 %v574, %v687
    %v704 = vadd.f32 %v575, %v688
    %v705 = vadd.f32 %v576, %v689
    %v706 = vadd.f32 %v577, %v690
    %v707 = vadd.f32 %v578, %v691
    %s708 = scalar_lea.vmem %s0, 640
    %v709 = vld [vmem:[%s708] sm:$0xff]
    %v710 = vld [vmem:[%s708 + $0x8] sm:$0xff]
    %v711 = vld [vmem:[%s708 + $0x10] sm:$0xff]
    %v712 = vld [vmem:[%s708 + $0x18] sm:$0xff]
    %v713 = vld [vmem:[%s708 + $0x20] sm:$0xff]
    %v714 = vld [vmem:[%s708 + $0x28] sm:$0xff]
    %v715 = vld [vmem:[%s708 + $0x30] sm:$0xff]
    %v716 = vld [vmem:[%s708 + $0x38] sm:$0xff]
    %v717 = vld [vmem:[%s708 + $0x40] sm:$0xff]
    %v718 = vld [vmem:[%s708 + $0x48] sm:$0xff]
    %v719 = vld [vmem:[%s708 + $0x50] sm:$0xff]
    %v720 = vld [vmem:[%s708 + $0x58] sm:$0xff]
    %v721 = vld [vmem:[%s708 + $0x60] sm:$0xff]
    %v722 = vld [vmem:[%s708 + $0x68] sm:$0xff]
    %v723 = vld [vmem:[%s708 + $0x70] sm:$0xff]
    %v724 = vld [vmem:[%s708 + $0x78] sm:$0xff]
    %725 = vset.pattern.permute.xlu0 5
    %726 = vperm.xlu0 %725, %v32
    %v727 = vpop.permute.xlu0 %726
    %729 = vset.pattern.permute.xlu0 5
    %730 = vperm.xlu0 %729, %v33
    %v731 = vpop.permute.xlu0 %730
    %733 = vset.pattern.permute.xlu0 5
    %734 = vperm.xlu0 %733, %v34
    %v735 = vpop.permute.xlu0 %734
    %737 = vset.pattern.permute.xlu0 5
    %738 = vperm.xlu0 %737, %v35
    %v739 = vpop.permute.xlu0 %738
    %741 = vset.pattern.permute.xlu0 5
    %742 = vperm.xlu0 %741, %v36
    %v743 = vpop.permute.xlu0 %742
    %745 = vset.pattern.permute.xlu0 5
    %746 = vperm.xlu0 %745, %v37
    %v747 = vpop.permute.xlu0 %746
    %749 = vset.pattern.permute.xlu0 5
    %750 = vperm.xlu0 %749, %v38
    %v751 = vpop.permute.xlu0 %750
    %753 = vset.pattern.permute.xlu0 5
    %754 = vperm.xlu0 %753, %v39
    %v755 = vpop.permute.xlu0 %754
    %757 = vset.pattern.permute.xlu0 5
    %758 = vperm.xlu0 %757, %v40
    %v759 = vpop.permute.xlu0 %758
    %761 = vset.pattern.permute.xlu0 5
    %762 = vperm.xlu0 %761, %v41
    %v763 = vpop.permute.xlu0 %762
    %765 = vset.pattern.permute.xlu0 5
    %766 = vperm.xlu0 %765, %v42
    %v767 = vpop.permute.xlu0 %766
    %769 = vset.pattern.permute.xlu0 5
    %770 = vperm.xlu0 %769, %v43
    %v771 = vpop.permute.xlu0 %770
    %773 = vset.pattern.permute.xlu0 5
    %774 = vperm.xlu0 %773, %v44
    %v775 = vpop.permute.xlu0 %774
    %777 = vset.pattern.permute.xlu0 5
    %778 = vperm.xlu0 %777, %v45
    %v779 = vpop.permute.xlu0 %778
    %781 = vset.pattern.permute.xlu0 5
    %782 = vperm.xlu0 %781, %v46
    %v783 = vpop.permute.xlu0 %782
    %785 = vset.pattern.permute.xlu0 5
    %786 = vperm.xlu0 %785, %v47
    %v787 = vpop.permute.xlu0 %786
    %vm789 = vcmp.eq.f32.partialorder %v14, %v727
    %vm790 = vcmp.eq.f32.partialorder %v14, %v731
    %vm791 = vcmp.eq.f32.partialorder %v14, %v735
    %vm792 = vcmp.eq.f32.partialorder %v14, %v739
    %vm793 = vcmp.eq.f32.partialorder %v14, %v743
    %vm794 = vcmp.eq.f32.partialorder %v14, %v747
    %vm795 = vcmp.eq.f32.partialorder %v14, %v751
    %vm796 = vcmp.eq.f32.partialorder %v14, %v755
    %vm797 = vcmp.eq.f32.partialorder %v14, %v759
    %vm798 = vcmp.eq.f32.partialorder %v14, %v763
    %vm799 = vcmp.eq.f32.partialorder %v14, %v767
    %vm800 = vcmp.eq.f32.partialorder %v14, %v771
    %vm801 = vcmp.eq.f32.partialorder %v14, %v775
    %vm802 = vcmp.eq.f32.partialorder %v14, %v779
    %vm803 = vcmp.eq.f32.partialorder %v14, %v783
    %vm804 = vcmp.eq.f32.partialorder %v14, %v787
    %v805 = vsel %vm789, %v709, 0.0
    %v806 = vsel %vm790, %v710, 0.0
    %v807 = vsel %vm791, %v711, 0.0
    %v808 = vsel %vm792, %v712, 0.0
    %v809 = vsel %vm793, %v713, 0.0
    %v810 = vsel %vm794, %v714, 0.0
    %v811 = vsel %vm795, %v715, 0.0
    %v812 = vsel %vm796, %v716, 0.0
    %v813 = vsel %vm797, %v717, 0.0
    %v814 = vsel %vm798, %v718, 0.0
    %v815 = vsel %vm799, %v719, 0.0
    %v816 = vsel %vm800, %v720, 0.0
    %v817 = vsel %vm801, %v721, 0.0
    %v818 = vsel %vm802, %v722, 0.0
    %v819 = vsel %vm803, %v723, 0.0
    %v820 = vsel %vm804, %v724, 0.0
    %v821 = vadd.f32 %v692, %v805
    %v822 = vadd.f32 %v693, %v806
    %v823 = vadd.f32 %v694, %v807
    %v824 = vadd.f32 %v695, %v808
    %v825 = vadd.f32 %v696, %v809
    %v826 = vadd.f32 %v697, %v810
    %v827 = vadd.f32 %v698, %v811
    %v828 = vadd.f32 %v699, %v812
    %v829 = vadd.f32 %v700, %v813
    %v830 = vadd.f32 %v701, %v814
    %v831 = vadd.f32 %v702, %v815
    %v832 = vadd.f32 %v703, %v816
    %v833 = vadd.f32 %v704, %v817
    %v834 = vadd.f32 %v705, %v818
    %v835 = vadd.f32 %v706, %v819
    %v836 = vadd.f32 %v707, %v820
    %s837 = scalar_lea.vmem %s0, 768
    %v838 = vld [vmem:[%s837] sm:$0xff]
    %v839 = vld [vmem:[%s837 + $0x8] sm:$0xff]
    %v840 = vld [vmem:[%s837 + $0x10] sm:$0xff]
    %v841 = vld [vmem:[%s837 + $0x18] sm:$0xff]
    %v842 = vld [vmem:[%s837 + $0x20] sm:$0xff]
    %v843 = vld [vmem:[%s837 + $0x28] sm:$0xff]
    %v844 = vld [vmem:[%s837 + $0x30] sm:$0xff]
    %v845 = vld [vmem:[%s837 + $0x38] sm:$0xff]
    %v846 = vld [vmem:[%s837 + $0x40] sm:$0xff]
    %v847 = vld [vmem:[%s837 + $0x48] sm:$0xff]
    %v848 = vld [vmem:[%s837 + $0x50] sm:$0xff]
    %v849 = vld [vmem:[%s837 + $0x58] sm:$0xff]
    %v850 = vld [vmem:[%s837 + $0x60] sm:$0xff]
    %v851 = vld [vmem:[%s837 + $0x68] sm:$0xff]
    %v852 = vld [vmem:[%s837 + $0x70] sm:$0xff]
    %v853 = vld [vmem:[%s837 + $0x78] sm:$0xff]
    %854 = vset.pattern.permute.xlu0 6
    %855 = vperm.xlu0 %854, %v32
    %v856 = vpop.permute.xlu0 %855
    %858 = vset.pattern.permute.xlu0 6
    %859 = vperm.xlu0 %858, %v33
    %v860 = vpop.permute.xlu0 %859
    %862 = vset.pattern.permute.xlu0 6
    %863 = vperm.xlu0 %862, %v34
    %v864 = vpop.permute.xlu0 %863
    %866 = vset.pattern.permute.xlu0 6
    %867 = vperm.xlu0 %866, %v35
    %v868 = vpop.permute.xlu0 %867
    %870 = vset.pattern.permute.xlu0 6
    %871 = vperm.xlu0 %870, %v36
    %v872 = vpop.permute.xlu0 %871
    %874 = vset.pattern.permute.xlu0 6
    %875 = vperm.xlu0 %874, %v37
    %v876 = vpop.permute.xlu0 %875
    %878 = vset.pattern.permute.xlu0 6
    %879 = vperm.xlu0 %878, %v38
    %v880 = vpop.permute.xlu0 %879
    %882 = vset.pattern.permute.xlu0 6
    %883 = vperm.xlu0 %882, %v39
    %v884 = vpop.permute.xlu0 %883
    %886 = vset.pattern.permute.xlu0 6
    %887 = vperm.xlu0 %886, %v40
    %v888 = vpop.permute.xlu0 %887
    %890 = vset.pattern.permute.xlu0 6
    %891 = vperm.xlu0 %890, %v41
    %v892 = vpop.permute.xlu0 %891
    %894 = vset.pattern.permute.xlu0 6
    %895 = vperm.xlu0 %894, %v42
    %v896 = vpop.permute.xlu0 %895
    %898 = vset.pattern.permute.xlu0 6
    %899 = vperm.xlu0 %898, %v43
    %v900 = vpop.permute.xlu0 %899
    %902 = vset.pattern.permute.xlu0 6
    %903 = vperm.xlu0 %902, %v44
    %v904 = vpop.permute.xlu0 %903
    %906 = vset.pattern.permute.xlu0 6
    %907 = vperm.xlu0 %906, %v45
    %v908 = vpop.permute.xlu0 %907
    %910 = vset.pattern.permute.xlu0 6
    %911 = vperm.xlu0 %910, %v46
    %v912 = vpop.permute.xlu0 %911
    %914 = vset.pattern.permute.xlu0 6
    %915 = vperm.xlu0 %914, %v47
    %v916 = vpop.permute.xlu0 %915
    %vm918 = vcmp.eq.f32.partialorder %v14, %v856
    %vm919 = vcmp.eq.f32.partialorder %v14, %v860
    %vm920 = vcmp.eq.f32.partialorder %v14, %v864
    %vm921 = vcmp.eq.f32.partialorder %v14, %v868
    %vm922 = vcmp.eq.f32.partialorder %v14, %v872
    %vm923 = vcmp.eq.f32.partialorder %v14, %v876
    %vm924 = vcmp.eq.f32.partialorder %v14, %v880
    %vm925 = vcmp.eq.f32.partialorder %v14, %v884
    %vm926 = vcmp.eq.f32.partialorder %v14, %v888
    %vm927 = vcmp.eq.f32.partialorder %v14, %v892
    %vm928 = vcmp.eq.f32.partialorder %v14, %v896
    %vm929 = vcmp.eq.f32.partialorder %v14, %v900
    %vm930 = vcmp.eq.f32.partialorder %v14, %v904
    %vm931 = vcmp.eq.f32.partialorder %v14, %v908
    %vm932 = vcmp.eq.f32.partialorder %v14, %v912
    %vm933 = vcmp.eq.f32.partialorder %v14, %v916
    %v934 = vsel %vm918, %v838, 0.0
    %v935 = vsel %vm919, %v839, 0.0
    %v936 = vsel %vm920, %v840, 0.0
    %v937 = vsel %vm921, %v841, 0.0
    %v938 = vsel %vm922, %v842, 0.0
    %v939 = vsel %vm923, %v843, 0.0
    %v940 = vsel %vm924, %v844, 0.0
    %v941 = vsel %vm925, %v845, 0.0
    %v942 = vsel %vm926, %v846, 0.0
    %v943 = vsel %vm927, %v847, 0.0
    %v944 = vsel %vm928, %v848, 0.0
    %v945 = vsel %vm929, %v849, 0.0
    %v946 = vsel %vm930, %v850, 0.0
    %v947 = vsel %vm931, %v851, 0.0
    %v948 = vsel %vm932, %v852, 0.0
    %v949 = vsel %vm933, %v853, 0.0
    %v950 = vadd.f32 %v821, %v934
    %v951 = vadd.f32 %v822, %v935
    %v952 = vadd.f32 %v823, %v936
    %v953 = vadd.f32 %v824, %v937
    %v954 = vadd.f32 %v825, %v938
    %v955 = vadd.f32 %v826, %v939
    %v956 = vadd.f32 %v827, %v940
    %v957 = vadd.f32 %v828, %v941
    %v958 = vadd.f32 %v829, %v942
    %v959 = vadd.f32 %v830, %v943
    %v960 = vadd.f32 %v831, %v944
    %v961 = vadd.f32 %v832, %v945
    %v962 = vadd.f32 %v833, %v946
    %v963 = vadd.f32 %v834, %v947
    %v964 = vadd.f32 %v835, %v948
    %v965 = vadd.f32 %v836, %v949
    %s966 = scalar_lea.vmem %s0, 896
    %v967 = vld [vmem:[%s966] sm:$0xff]
    %v968 = vld [vmem:[%s966 + $0x8] sm:$0xff]
    %v969 = vld [vmem:[%s966 + $0x10] sm:$0xff]
    %v970 = vld [vmem:[%s966 + $0x18] sm:$0xff]
    %v971 = vld [vmem:[%s966 + $0x20] sm:$0xff]
    %v972 = vld [vmem:[%s966 + $0x28] sm:$0xff]
    %v973 = vld [vmem:[%s966 + $0x30] sm:$0xff]
    %v974 = vld [vmem:[%s966 + $0x38] sm:$0xff]
    %v975 = vld [vmem:[%s966 + $0x40] sm:$0xff]
    %v976 = vld [vmem:[%s966 + $0x48] sm:$0xff]
    %v977 = vld [vmem:[%s966 + $0x50] sm:$0xff]
    %v978 = vld [vmem:[%s966 + $0x58] sm:$0xff]
    %v979 = vld [vmem:[%s966 + $0x60] sm:$0xff]
    %v980 = vld [vmem:[%s966 + $0x68] sm:$0xff]
    %v981 = vld [vmem:[%s966 + $0x70] sm:$0xff]
    %v982 = vld [vmem:[%s966 + $0x78] sm:$0xff]
    %983 = vset.pattern.permute.xlu0 7
    %984 = vperm.xlu0 %983, %v32
    %v985 = vpop.permute.xlu0 %984
    %987 = vset.pattern.permute.xlu0 7
    %988 = vperm.xlu0 %987, %v33
    %v989 = vpop.permute.xlu0 %988
    %991 = vset.pattern.permute.xlu0 7
    %992 = vperm.xlu0 %991, %v34
    %v993 = vpop.permute.xlu0 %992
    %995 = vset.pattern.permute.xlu0 7
    %996 = vperm.xlu0 %995, %v35
    %v997 = vpop.permute.xlu0 %996
    %999 = vset.pattern.permute.xlu0 7
    %1000 = vperm.xlu0 %999, %v36
    %v1001 = vpop.permute.xlu0 %1000
    %1003 = vset.pattern.permute.xlu0 7
    %1004 = vperm.xlu0 %1003, %v37
    %v1005 = vpop.permute.xlu0 %1004
    %1007 = vset.pattern.permute.xlu0 7
    %1008 = vperm.xlu0 %1007, %v38
    %v1009 = vpop.permute.xlu0 %1008
    %1011 = vset.pattern.permute.xlu0 7
    %1012 = vperm.xlu0 %1011, %v39
    %v1013 = vpop.permute.xlu0 %1012
    %1015 = vset.pattern.permute.xlu0 7
    %1016 = vperm.xlu0 %1015, %v40
    %v1017 = vpop.permute.xlu0 %1016
    %1019 = vset.pattern.permute.xlu0 7
    %1020 = vperm.xlu0 %1019, %v41
    %v1021 = vpop.permute.xlu0 %1020
    %1023 = vset.pattern.permute.xlu0 7
    %1024 = vperm.xlu0 %1023, %v42
    %v1025 = vpop.permute.xlu0 %1024
    %1027 = vset.pattern.permute.xlu0 7
    %1028 = vperm.xlu0 %1027, %v43
    %v1029 = vpop.permute.xlu0 %1028
    %1031 = vset.pattern.permute.xlu0 7
    %1032 = vperm.xlu0 %1031, %v44
    %v1033 = vpop.permute.xlu0 %1032
    %1035 = vset.pattern.permute.xlu0 7
    %1036 = vperm.xlu0 %1035, %v45
    %v1037 = vpop.permute.xlu0 %1036
    %1039 = vset.pattern.permute.xlu0 7
    %1040 = vperm.xlu0 %1039, %v46
    %v1041 = vpop.permute.xlu0 %1040
    %1043 = vset.pattern.permute.xlu0 7
    %1044 = vperm.xlu0 %1043, %v47
    %v1045 = vpop.permute.xlu0 %1044
    %vm1047 = vcmp.eq.f32.partialorder %v14, %v985
    %vm1048 = vcmp.eq.f32.partialorder %v14, %v989
    %vm1049 = vcmp.eq.f32.partialorder %v14, %v993
    %vm1050 = vcmp.eq.f32.partialorder %v14, %v997
    %vm1051 = vcmp.eq.f32.partialorder %v14, %v1001
    %vm1052 = vcmp.eq.f32.partialorder %v14, %v1005
    %vm1053 = vcmp.eq.f32.partialorder %v14, %v1009
    %vm1054 = vcmp.eq.f32.partialorder %v14, %v1013
    %vm1055 = vcmp.eq.f32.partialorder %v14, %v1017
    %vm1056 = vcmp.eq.f32.partialorder %v14, %v1021
    %vm1057 = vcmp.eq.f32.partialorder %v14, %v1025
    %vm1058 = vcmp.eq.f32.partialorder %v14, %v1029
    %vm1059 = vcmp.eq.f32.partialorder %v14, %v1033
    %vm1060 = vcmp.eq.f32.partialorder %v14, %v1037
    %vm1061 = vcmp.eq.f32.partialorder %v14, %v1041
    %vm1062 = vcmp.eq.f32.partialorder %v14, %v1045
    %v1063 = vsel %vm1047, %v967, 0.0
    %v1064 = vsel %vm1048, %v968, 0.0
    %v1065 = vsel %vm1049, %v969, 0.0
    %v1066 = vsel %vm1050, %v970, 0.0
    %v1067 = vsel %vm1051, %v971, 0.0
    %v1068 = vsel %vm1052, %v972, 0.0
    %v1069 = vsel %vm1053, %v973, 0.0
    %v1070 = vsel %vm1054, %v974, 0.0
    %v1071 = vsel %vm1055, %v975, 0.0
    %v1072 = vsel %vm1056, %v976, 0.0
    %v1073 = vsel %vm1057, %v977, 0.0
    %v1074 = vsel %vm1058, %v978, 0.0
    %v1075 = vsel %vm1059, %v979, 0.0
    %v1076 = vsel %vm1060, %v980, 0.0
    %v1077 = vsel %vm1061, %v981, 0.0
    %v1078 = vsel %vm1062, %v982, 0.0
    %v1079 = vadd.f32 %v950, %v1063
    %v1080 = vadd.f32 %v951, %v1064
    %v1081 = vadd.f32 %v952, %v1065
    %v1082 = vadd.f32 %v953, %v1066
    %v1083 = vadd.f32 %v954, %v1067
    %v1084 = vadd.f32 %v955, %v1068
    %v1085 = vadd.f32 %v956, %v1069
    %v1086 = vadd.f32 %v957, %v1070
    %v1087 = vadd.f32 %v958, %v1071
    %v1088 = vadd.f32 %v959, %v1072
    %v1089 = vadd.f32 %v960, %v1073
    %v1090 = vadd.f32 %v961, %v1074
    %v1091 = vadd.f32 %v962, %v1075
    %v1092 = vadd.f32 %v963, %v1076
    %v1093 = vadd.f32 %v964, %v1077
    %v1094 = vadd.f32 %v965, %v1078
    %vm1095 = vcmask 408576
    %v1096 = vsel %vm1095, %v1079, 0.0
    %v1097 = vsel %vm1095, %v1080, 0.0
    %v1098 = vadd.f32 %v1096, %v1097
    %v1099 = vsel %vm1095, %v1081, 0.0
    %v1100 = vadd.f32 %v1098, %v1099
    %v1101 = vsel %vm1095, %v1082, 0.0
    %v1102 = vadd.f32 %v1100, %v1101
    %v1103 = vsel %vm1095, %v1083, 0.0
    %v1104 = vadd.f32 %v1102, %v1103
    %v1105 = vsel %vm1095, %v1084, 0.0
    %v1106 = vadd.f32 %v1104, %v1105
    %v1107 = vsel %vm1095, %v1085, 0.0
    %v1108 = vadd.f32 %v1106, %v1107
    %v1109 = vsel %vm1095, %v1086, 0.0
    %v1110 = vadd.f32 %v1108, %v1109
    %v1111 = vsel %vm1095, %v1087, 0.0
    %v1112 = vadd.f32 %v1110, %v1111
    %v1113 = vsel %vm1095, %v1088, 0.0
    %v1114 = vadd.f32 %v1112, %v1113
    %v1115 = vsel %vm1095, %v1089, 0.0
    %v1116 = vadd.f32 %v1114, %v1115
    %v1117 = vsel %vm1095, %v1090, 0.0
    %v1118 = vadd.f32 %v1116, %v1117
    %v1119 = vsel %vm1095, %v1091, 0.0
    %v1120 = vadd.f32 %v1118, %v1119
    %v1121 = vsel %vm1095, %v1092, 0.0
    %v1122 = vadd.f32 %v1120, %v1121
    %v1123 = vsel %vm1095, %v1093, 0.0
    %v1124 = vadd.f32 %v1122, %v1123
    %v1125 = vsel %vm1095, %v1094, 0.0
    %v1126 = vadd.f32 %v1124, %v1125
    %1127 = vadd.xlane.f32.xlu0 %v1126
    %v1128 = vpop.xlane.xlu0 %1127
    %v1129 = vrot.slane %v1128, 4
    %v1130 = vadd.f32 %v1128, %v1129
    %v1131 = vrot.slane %v1130, 2
    %v1132 = vadd.f32 %v1130, %v1131
    %v1133 = vrot.slane %v1132, 1
    %v1134 = vadd.f32 %v1132, %v1133
    %s1135 = vtos %v1134
    %v1136 = vstv %s1135
    %1137 = vst [vmem:[#allocation2] sm:$0xff] %v1136
    // Predicated region
    $region10: #{tpu_custom_call.1} parent=1 // pred_check
      _
    $region11: #{tpu_custom_call.1} parent=1 // pred_check_branch
      %1139 = sbr.rel (0) target = $region13
    $region12: #{tpu_custom_call.1} parent=1 // pred_region
      %s1141 = ssub.s32 128, 128
      %1142 = vsyncadd [#allocation3], %s1141
      %s1144 = sshll.u32 [#allocation2], 4
      %s1145 = int_to_ptr.vmem [resolvable:$true] %s1144
      %1147 = dma.vmem_to_hbm [thread:$0]  %s1145, 128, %s2, [#allocation3]
    $region13: #{tpu_custom_call.1} parent=1 // pred_fallthru
      _
    // Predicated region
    $region14: #{tpu_custom_call.1} parent=1 // pred_check
      _
    $region15: #{tpu_custom_call.1} parent=1 // pred_check_branch
      %1149 = sbr.rel (0) target = $region17
    $region16: #{tpu_custom_call.1} parent=1 // pred_region
      %1150 = dma.done [#allocation3], 128
    $region17: #{tpu_custom_call.1} parent=1 // pred_fallthru
      _
    %1151 = vsyncpa [#allocation3], 1

</llo_original>
